<compile_context>
chip_gen: v7x
topology: tpu7x:2x2x1
jax: 0.10.0
libtpu: 0.0.40
codegen_flags: <defaults>
</compile_context>

<pallas_src>
import functools

import jax
import jax.numpy as jnp
import numpy as np
from jax.experimental import pallas as pl
from jax.experimental.pallas import tpu as pltpu

LN_EPS = 1e-5
N_FC_LAYERS = 3

# Packed f32 tables:
#   vec2 (4, 2*u2):  0: [d2.b | d4.b]   1: [d6.b | d7.b]
#                    2: [ln1.g | alpha*ln2.g]   3: [ln1.b | alpha*ln2.b]
#   vecu (7, u2):    0: d5.b   1-3: fc_i first Linear bias   4-6: fc_i second Linear bias
# Packed bf16 square-weight stack fcw (6, u2, u2):
#   [fc0.W1, fc0.W2, fc1.W1, fc1.W2, fc2.W1, fc2.W2]


def _mm(x, w):
    # bf16 MXU matmul with f32 accumulation (weights are already bf16).
    return jnp.dot(x.astype(jnp.bfloat16), w, preferred_element_type=jnp.float32)


def _normalize(x):
    # LayerNorm core (no affine): per-row mean/var over the last axis.
    m = jnp.mean(x, axis=-1, keepdims=True)
    c = x - m
    v = jnp.mean(c * c, axis=-1, keepdims=True)
    return c * jax.lax.rsqrt(v + LN_EPS)


# --------------------------------- kernel ----------------------------------
def encoder_kernel(x_ref, wA_ref, bA_ref, wB_ref, wC_ref, w5_ref,
                   fcw_ref, vec2_ref, vecu_ref, out_ref):
    u2 = w5_ref.shape[1]
    vec2 = vec2_ref[...]                      # (4, 2*u2) f32
    vecu = vecu_ref[...]                      # (7, u2)   f32

    # Fused fp/mf branches: three block-diagonal matmuls.
    h = jnp.maximum(_mm(x_ref[...], wA_ref[...]) + bA_ref[...], 0.0)   # dense1 (+) dense3
    h = jnp.maximum(_mm(h, wB_ref[...]) + vec2[0:1], 0.0)              # dense2 (+) dense4
    h = _mm(h, wC_ref[...]) + vec2[1:2]                                # dense6 (+) dense7

    # Per-half LayerNorm statistics; fused affine (alpha folded into mf half).
    n = jnp.concatenate([_normalize(h[:, :u2]), _normalize(h[:, u2:])], axis=1)
    emb = n * vec2[2:3] + vec2[3:4]                                    # (TB, 2*u2)

    # dense5 on the contiguous [fp_ln | alpha*mf_ln] slab -> z.
    z = jnp.maximum(_mm(emb, w5_ref[...]) + vecu[0:1], 0.0)

    # fc_layers: 3 x (Linear -> ReLU -> Linear -> ReLU).
    x = z
    states = []
    for i in range(N_FC_LAYERS):
        x = jnp.maximum(_mm(x, fcw_ref[2 * i]) + vecu[1 + i:2 + i], 0.0)
        x = jnp.maximum(_mm(x, fcw_ref[2 * i + 1]) + vecu[4 + i:5 + i], 0.0)
        states.append(x)

    # One unmasked, lane-dense store of the whole (TB, 4*u2) result slab.
    out_ref[...] = jnp.concatenate([z] + states, axis=1)


# -------------------------------- wrapper -----------------------------------
def _round_up(x, m):
    return (x + m - 1) // m * m


@functools.partial(jax.jit, static_argnames=("tile_b",))
def fingerprint_formula_encoder(encode_fp, encode_mf, kp, tile_b=256):
    """Run the Pallas encoder. `kp` comes from prepare_kernel_params(params)."""
    B = encode_fp.shape[0]
    u2 = kp["w5"].shape[1]
    x_dim = kp["wA"].shape[0]
    out_w = (1 + N_FC_LAYERS) * u2

    # Concatenate inputs and cast to bf16 in the wrapper (halves input DMA).
    x = jnp.concatenate([encode_fp.astype(jnp.bfloat16),
                         encode_mf.astype(jnp.bfloat16)], axis=1)

    # Batch tile: <= tile_b, 8-aligned, and sized so large batches keep >= 2
    # grid steps (megacore sharding on v7x; harmless on v5e/v6e).
    TB = max(8, min(tile_b, _round_up(pl.cdiv(B, 2), 8)))
    Bp = _round_up(B, TB)
    x = jnp.pad(x, ((0, Bp - B), (0, 0)))

    const2 = lambda i: (0, 0)      # constant block index -> weight stays in VMEM
    const3 = lambda i: (0, 0, 0)

    out = pl.pallas_call(
        encoder_kernel,
        out_shape=jax.ShapeDtypeStruct((Bp, out_w), jnp.float32),
        grid=(Bp // TB,),
        in_specs=[
            pl.BlockSpec((TB, x_dim), lambda i: (i, 0)),     # batch tile (bf16)
            pl.BlockSpec(kp["wA"].shape, const2),            # dense1 (+) dense3 (bf16)
            pl.BlockSpec(kp["bA"].shape, const2),            # fused bias (f32)
            pl.BlockSpec(kp["wB"].shape, const2),            # dense2 (+) dense4 (bf16)
            pl.BlockSpec(kp["wC"].shape, const2),            # dense6 (+) dense7 (bf16)
            pl.BlockSpec(kp["w5"].shape, const2),            # dense5 (bf16)
            pl.BlockSpec(kp["fcw"].shape, const3),           # fc weights (bf16)
            pl.BlockSpec(kp["vec2"].shape, const2),          # packed 2*u2-wide table
            pl.BlockSpec(kp["vecu"].shape, const2),          # packed u2-wide table
        ],
        out_specs=pl.BlockSpec((TB, out_w), lambda i: (i, 0)),
        compiler_params=pltpu.CompilerParams(
            dimension_semantics=("parallel",),   # megacore-shard batch tiles (v7x)
        ),
    )(x, kp["wA"], kp["bA"], kp["wB"], kp["wC"], kp["w5"],
      kp["fcw"], kp["vec2"], kp["vecu"])

    z = out[:B, :u2]
    # Transpose kept only to honor the torch contract state_stack = stack(dim=0)
    # -> (3, B, u2); if downstream accepted (B, 3, u2) this reshape+transpose
    # (an extra HBM round trip) could be dropped.
    state_stack = jnp.transpose(
        out[:B, u2:].reshape(B, N_FC_LAYERS, u2), (1, 0, 2))
    return z, state_stack


# --------------------------- parameter handling ------------------------------
def init_params(key, fp_dim, mf_dim, unit1, unit2):
    """Deterministic synthetic params (torch-like; Linear weights pre-transposed
    to (in_features, out_features))."""
    assert unit1 == 2 * unit2, "dense5 consumes cat([fp, mf]) of width 2*unit2 == unit1"
    keys = iter(jax.random.split(key, 32))

    def w(shape, fan_in):
        return jax.random.normal(next(keys), shape, jnp.float32) / np.sqrt(fan_in)

    def b(n):
        return 0.01 * jax.random.normal(next(keys), (1, n), jnp.float32)

    p = {}
    p["d1w"], p["d1b"] = w((fp_dim, unit1), fp_dim), b(unit1)
    p["d2w"], p["d2b"] = w((unit1, unit2), unit1), b(unit2)
    p["d6w"], p["d6b"] = w((unit2, unit2), unit2), b(unit2)
    p["ln1g"] = jnp.ones((1, unit2), jnp.float32)
    p["ln1b"] = jnp.zeros((1, unit2), jnp.float32)
    p["d3w"], p["d3b"] = w((mf_dim, unit2), mf_dim), b(unit2)
    p["d4w"], p["d4b"] = w((unit2, unit2), unit2), b(unit2)
    p["d7w"], p["d7b"] = w((unit2, unit2), unit2), b(unit2)
    p["ln2g"] = jnp.ones((1, unit2), jnp.float32)
    p["ln2b"] = jnp.zeros((1, unit2), jnp.float32)
    p["alpha"] = 1.0 + 0.1 * jax.random.normal(next(keys), (1, unit2), jnp.float32)
    p["d5w"], p["d5b"] = w((unit1, unit2), unit1), b(unit2)
    p["fcw1"] = w((N_FC_LAYERS, unit2, unit2), unit2)
    p["fcb1"] = 0.01 * jax.random.normal(next(keys), (N_FC_LAYERS, 1, unit2), jnp.float32)
    p["fcw2"] = w((N_FC_LAYERS, unit2, unit2), unit2)
    p["fcb2"] = 0.01 * jax.random.normal(next(keys), (N_FC_LAYERS, 1, unit2), jnp.float32)
    return p


def _block_diag(a, b):
    r1, c1 = a.shape
    r2, c2 = b.shape
    top = jnp.concatenate([a, jnp.zeros((r1, c2), a.dtype)], axis=1)
    bot = jnp.concatenate([jnp.zeros((r2, c1), b.dtype), b], axis=1)
    return jnp.concatenate([top, bot], axis=0)


def prepare_kernel_params(p):
    """One-time transform of module params into packed kernel inputs:
    block-diagonal fused bf16 matmul weights, alpha folded into the (f32)
    LayerNorm-2 gamma/beta, packed bias/LN tables."""
    u2 = p["d2w"].shape[1]
    bf16, f32 = jnp.bfloat16, jnp.float32

    wA = _block_diag(p["d1w"], p["d3w"]).astype(bf16)          # (fp+mf, u1+u2)
    bA = jnp.concatenate([p["d1b"], p["d3b"]], axis=1).astype(f32)
    wB = _block_diag(p["d2w"], p["d4w"]).astype(bf16)          # (u1+u2, 2*u2)
    wC = _block_diag(p["d6w"], p["d7w"]).astype(bf16)          # (2*u2, 2*u2)
    w5 = p["d5w"].astype(bf16)                                 # (2*u2, u2)

    g_fused = jnp.concatenate([p["ln1g"], p["alpha"] * p["ln2g"]], axis=1)
    b_fused = jnp.concatenate([p["ln1b"], p["alpha"] * p["ln2b"]], axis=1)
    vec2 = jnp.concatenate([
        jnp.concatenate([p["d2b"], p["d4b"]], axis=1),
        jnp.concatenate([p["d6b"], p["d7b"]], axis=1),
        g_fused, b_fused], axis=0).astype(f32)                 # (4, 2*u2)

    fcw = jnp.stack([p["fcw1"][0], p["fcw2"][0],
                     p["fcw1"][1], p["fcw2"][1],
                     p["fcw1"][2], p["fcw2"][2]], axis=0).astype(bf16)   # (6, u2, u2)
    vecu = jnp.concatenate([p["d5b"],
                            p["fcb1"].reshape(N_FC_LAYERS, u2),
                            p["fcb2"].reshape(N_FC_LAYERS, u2)],
                           axis=0).astype(f32)                 # (7, u2)
    return {"wA": wA, "bA": bA, "wB": wB, "wC": wC, "w5": w5,
            "fcw": fcw, "vec2": vec2, "vecu": vecu}


# ------------------------------ references -----------------------------------
def reference_f32(fp, mf, p):
    """Pure-f32 semantic reference mirroring the torch module (concat, alpha)."""
    relu = lambda x: jnp.maximum(x, 0.0)

    def ln(x, g, b):
        m = x.mean(-1, keepdims=True)
        v = ((x - m) ** 2).mean(-1, keepdims=True)
        return (x - m) / jnp.sqrt(v + LN_EPS) * g + b

    fp = relu(fp @ p["d1w"] + p["d1b"])
    fp = relu(fp @ p["d2w"] + p["d2b"])
    fp = ln(fp @ p["d6w"] + p["d6b"], p["ln1g"], p["ln1b"])
    mf = relu(mf @ p["d3w"] + p["d3b"])
    mf = relu(mf @ p["d4w"] + p["d4b"])
    mf = ln(mf @ p["d7w"] + p["d7b"], p["ln2g"], p["ln2b"])
    emb = jnp.concatenate([fp, p["alpha"] * mf], axis=1)
    z = relu(emb @ p["d5w"] + p["d5b"])
    x, states = z, []
    for i in range(N_FC_LAYERS):
        x = relu(x @ p["fcw1"][i] + p["fcb1"][i])
        x = relu(x @ p["fcw2"][i] + p["fcb2"][i])
        states.append(x)
    return z, jnp.stack(states, axis=0)


def reference_matched(encode_fp, encode_mf, kp):
    """Precision-matched reference (same packed params / bf16 matmul path)."""
    u2 = kp["w5"].shape[1]
    x = jnp.concatenate([encode_fp.astype(jnp.bfloat16),
                         encode_mf.astype(jnp.bfloat16)], axis=1)
    h = jnp.maximum(_mm(x, kp["wA"]) + kp["bA"], 0.0)
    h = jnp.maximum(_mm(h, kp["wB"]) + kp["vec2"][0:1], 0.0)
    h = _mm(h, kp["wC"]) + kp["vec2"][1:2]
    n = jnp.concatenate([_normalize(h[:, :u2]), _normalize(h[:, u2:])], axis=1)
    emb = n * kp["vec2"][2:3] + kp["vec2"][3:4]
    z = jnp.maximum(_mm(emb, kp["w5"]) + kp["vecu"][0:1], 0.0)
    x, states = z, []
    for i in range(N_FC_LAYERS):
        x = jnp.maximum(_mm(x, kp["fcw"][2 * i]) + kp["vecu"][1 + i:2 + i], 0.0)
        x = jnp.maximum(_mm(x, kp["fcw"][2 * i + 1]) + kp["vecu"][4 + i:5 + i], 0.0)
        states.append(x)
    return z, jnp.stack(states, axis=0)


# ----------------------------------- main ------------------------------------
if __name__ == "__main__":
    # Small shapes consistent with the module (unit1 = 2 * unit2 as in defaults).
    FP_DIM, MF_DIM, UNIT1, UNIT2 = 48, 10, 64, 32

    key = jax.random.PRNGKey(0)
    k_fp, k_mf, k_p, k_fp2, k_mf2 = jax.random.split(key, 5)
    params = init_params(k_p, FP_DIM, MF_DIM, UNIT1, UNIT2)
    kparams = prepare_kernel_params(params)

    # Case 1: tiny batch (single grid step).  Case 2: B=200 -> TB=104, grid of 2
    # (exercises batch tiling, resident weights across steps, padding slice).
    for B, k1, k2 in ((8, k_fp, k_mf), (200, k_fp2, k_mf2)):
        encode_fp = jax.random.uniform(k1, (B, FP_DIM), jnp.float32)
        encode_mf = jax.random.uniform(k2, (B, MF_DIM), jnp.float32) * 5.0

        z, state_stack = fingerprint_formula_encoder(encode_fp, encode_mf, kparams)
        jax.block_until_ready((z, state_stack))
        assert z.shape == (B, UNIT2)
        assert state_stack.shape == (N_FC_LAYERS, B, UNIT2)

        # Precision-matched check (tight).
        z_m, s_m = reference_matched(encode_fp, encode_mf, kparams)
        assert jnp.allclose(z, z_m, atol=2e-2, rtol=2e-2), "z mismatch (matched ref)"
        assert jnp.allclose(state_stack, s_m, atol=2e-2, rtol=2e-2), "state mismatch (matched ref)"

        # Semantic f32 check (loose tolerance accounts for bf16 matmul inputs).
        z_f, s_f = reference_f32(encode_fp, encode_mf, params)
        assert jnp.allclose(z, z_f, atol=1e-1, rtol=1e-1), "z mismatch (f32 ref)"
        assert jnp.allclose(state_stack, s_f, atol=1e-1, rtol=1e-1), "state mismatch (f32 ref)"

    print("KERNEL_OK")
</pallas_src>

<mosaic_0001>
module attributes {stable_mosaic.version = 11 : i64} {
  func.func @encoder_kernel(%arg0: i32, %arg1: memref<8x58xbf16, #tpu.memory_space<vmem>>, %arg2: memref<58x96xbf16, #tpu.memory_space<vmem>>, %arg3: memref<1x96xf32, #tpu.memory_space<vmem>>, %arg4: memref<96x64xbf16, #tpu.memory_space<vmem>>, %arg5: memref<64x64xbf16, #tpu.memory_space<vmem>>, %arg6: memref<64x32xbf16, #tpu.memory_space<vmem>>, %arg7: memref<6x32x32xbf16, #tpu.memory_space<vmem>>, %arg8: memref<4x64xf32, #tpu.memory_space<vmem>>, %arg9: memref<7x32xf32, #tpu.memory_space<vmem>>, %arg10: memref<8x128xf32, #tpu.memory_space<vmem>>) attributes {dimension_semantics = [#tpu.dimension_semantics<parallel>], iteration_bounds = array<i64: 1>, scalar_prefetch = 0 : i64, scratch_operands = 0 : i64, tpu.core_type = #tpu.core_type<tc>, window_params = [{transform_indices = @transform_0, window_bounds = array<i64: 8, 58>}, {pipeline_mode = #tpu.pipeline_mode<synchronous>, transform_indices = @transform_1, window_bounds = array<i64: 58, 96>}, {pipeline_mode = #tpu.pipeline_mode<synchronous>, transform_indices = @transform_2, window_bounds = array<i64: 1, 96>}, {pipeline_mode = #tpu.pipeline_mode<synchronous>, transform_indices = @transform_3, window_bounds = array<i64: 96, 64>}, {pipeline_mode = #tpu.pipeline_mode<synchronous>, transform_indices = @transform_4, window_bounds = array<i64: 64, 64>}, {pipeline_mode = #tpu.pipeline_mode<synchronous>, transform_indices = @transform_5, window_bounds = array<i64: 64, 32>}, {pipeline_mode = #tpu.pipeline_mode<synchronous>, transform_indices = @transform_6, window_bounds = array<i64: 6, 32, 32>}, {pipeline_mode = #tpu.pipeline_mode<synchronous>, transform_indices = @transform_7, window_bounds = array<i64: 4, 64>}, {pipeline_mode = #tpu.pipeline_mode<synchronous>, transform_indices = @transform_8, window_bounds = array<i64: 7, 32>}, {transform_indices = @transform_9, window_bounds = array<i64: 8, 128>}]} {
    %c0 = arith.constant 0 : index
    %c0_0 = arith.constant 0 : index
    %0 = vector.load %arg8[%c0, %c0_0] : memref<4x64xf32, #tpu.memory_space<vmem>>, vector<4x64xf32>
    %c0_1 = arith.constant 0 : index
    %c0_2 = arith.constant 0 : index
    %1 = vector.load %arg9[%c0_1, %c0_2] : memref<7x32xf32, #tpu.memory_space<vmem>>, vector<7x32xf32>
    %c0_3 = arith.constant 0 : index
    %c0_4 = arith.constant 0 : index
    %2 = vector.load %arg1[%c0_3, %c0_4] : memref<8x58xbf16, #tpu.memory_space<vmem>>, vector<8x58xbf16>
    %c0_5 = arith.constant 0 : index
    %c0_6 = arith.constant 0 : index
    %3 = vector.load %arg2[%c0_5, %c0_6] : memref<58x96xbf16, #tpu.memory_space<vmem>>, vector<58x96xbf16>
    %cst = arith.constant dense<0.000000e+00> : vector<8x96xf32>
    %4 = tpu.matmul %2, %3, %cst {dimension_numbers = #tpu.dot_dimension_numbers<[1], [0], [0], [1], [0, 0, 1, 1], [], []>} : vector<8x58xbf16>, vector<58x96xbf16>, vector<8x96xf32> -> vector<8x96xf32>
    %c0_7 = arith.constant 0 : index
    %c0_8 = arith.constant 0 : index
    %5 = vector.load %arg3[%c0_7, %c0_8] : memref<1x96xf32, #tpu.memory_space<vmem>>, vector<1x96xf32>
    %6 = vector.broadcast %5 : vector<1x96xf32> to vector<8x96xf32>
    %7 = arith.addf %4, %6 : vector<8x96xf32>
    %cst_9 = arith.constant 0.000000e+00 : f32
    %8 = vector.broadcast %cst_9 : f32 to vector<8x96xf32>
    %9 = arith.maximumf %7, %8 : vector<8x96xf32>
    %c0_10 = arith.constant 0 : index
    %c0_11 = arith.constant 0 : index
    %10 = vector.load %arg4[%c0_10, %c0_11] : memref<96x64xbf16, #tpu.memory_space<vmem>>, vector<96x64xbf16>
    %11 = arith.truncf %9 : vector<8x96xf32> to vector<8x96xbf16>
    %cst_12 = arith.constant dense<0.000000e+00> : vector<8x64xf32>
    %12 = tpu.matmul %11, %10, %cst_12 {dimension_numbers = #tpu.dot_dimension_numbers<[1], [0], [0], [1], [0, 0, 1, 1], [], []>} : vector<8x96xbf16>, vector<96x64xbf16>, vector<8x64xf32> -> vector<8x64xf32>
    %13 = vector.extract_strided_slice %0 {offsets = [0, 0], sizes = [1, 64], strides = [1, 1]} : vector<4x64xf32> to vector<1x64xf32>
    %14 = vector.broadcast %13 : vector<1x64xf32> to vector<8x64xf32>
    %15 = arith.addf %12, %14 : vector<8x64xf32>
    %cst_13 = arith.constant 0.000000e+00 : f32
    %16 = vector.broadcast %cst_13 : f32 to vector<8x64xf32>
    %17 = arith.maximumf %15, %16 : vector<8x64xf32>
    %c0_14 = arith.constant 0 : index
    %c0_15 = arith.constant 0 : index
    %18 = vector.load %arg5[%c0_14, %c0_15] : memref<64x64xbf16, #tpu.memory_space<vmem>>, vector<64x64xbf16>
    %19 = arith.truncf %17 : vector<8x64xf32> to vector<8x64xbf16>
    %cst_16 = arith.constant dense<0.000000e+00> : vector<8x64xf32>
    %20 = tpu.matmul %19, %18, %cst_16 {dimension_numbers = #tpu.dot_dimension_numbers<[1], [0], [0], [1], [0, 0, 1, 1], [], []>} : vector<8x64xbf16>, vector<64x64xbf16>, vector<8x64xf32> -> vector<8x64xf32>
    %21 = vector.extract_strided_slice %0 {offsets = [1, 0], sizes = [1, 64], strides = [1, 1]} : vector<4x64xf32> to vector<1x64xf32>
    %22 = vector.broadcast %21 : vector<1x64xf32> to vector<8x64xf32>
    %23 = arith.addf %20, %22 : vector<8x64xf32>
    %24 = vector.extract_strided_slice %23 {offsets = [0, 0], sizes = [8, 32], strides = [1, 1]} : vector<8x64xf32> to vector<8x32xf32>
    %cst_17 = arith.constant dense<0.000000e+00> : vector<8xf32>
    %25 = vector.multi_reduction <add>, %24, %cst_17 [1] : vector<8x32xf32> to vector<8xf32>
    %26 = vector.shape_cast %25 : vector<8xf32> to vector<8x1xf32>
    %cst_18 = arith.constant 3.200000e+01 : f32
    %27 = vector.broadcast %cst_18 : f32 to vector<8x1xf32>
    %28 = arith.divf %26, %27 : vector<8x1xf32>
    %29 = vector.broadcast %28 : vector<8x1xf32> to vector<8x32xf32>
    %30 = arith.subf %24, %29 : vector<8x32xf32>
    %31 = arith.mulf %30, %30 : vector<8x32xf32>
    %cst_19 = arith.constant dense<0.000000e+00> : vector<8xf32>
    %32 = vector.multi_reduction <add>, %31, %cst_19 [1] : vector<8x32xf32> to vector<8xf32>
    %33 = vector.shape_cast %32 : vector<8xf32> to vector<8x1xf32>
    %cst_20 = arith.constant 3.200000e+01 : f32
    %34 = vector.broadcast %cst_20 : f32 to vector<8x1xf32>
    %35 = arith.divf %33, %34 : vector<8x1xf32>
    %cst_21 = arith.constant 9.99999974E-6 : f32
    %36 = vector.broadcast %cst_21 : f32 to vector<8x1xf32>
    %37 = arith.addf %35, %36 : vector<8x1xf32>
    %38 = math.rsqrt %37 : vector<8x1xf32>
    %39 = vector.broadcast %38 : vector<8x1xf32> to vector<8x32xf32>
    %40 = arith.mulf %30, %39 : vector<8x32xf32>
    %41 = vector.extract_strided_slice %23 {offsets = [0, 32], sizes = [8, 32], strides = [1, 1]} : vector<8x64xf32> to vector<8x32xf32>
    %cst_22 = arith.constant dense<0.000000e+00> : vector<8xf32>
    %42 = vector.multi_reduction <add>, %41, %cst_22 [1] : vector<8x32xf32> to vector<8xf32>
    %43 = vector.shape_cast %42 : vector<8xf32> to vector<8x1xf32>
    %cst_23 = arith.constant 3.200000e+01 : f32
    %44 = vector.broadcast %cst_23 : f32 to vector<8x1xf32>
    %45 = arith.divf %43, %44 : vector<8x1xf32>
    %46 = vector.broadcast %45 : vector<8x1xf32> to vector<8x32xf32>
    %47 = arith.subf %41, %46 : vector<8x32xf32>
    %48 = arith.mulf %47, %47 : vector<8x32xf32>
    %cst_24 = arith.constant dense<0.000000e+00> : vector<8xf32>
    %49 = vector.multi_reduction <add>, %48, %cst_24 [1] : vector<8x32xf32> to vector<8xf32>
    %50 = vector.shape_cast %49 : vector<8xf32> to vector<8x1xf32>
    %cst_25 = arith.constant 3.200000e+01 : f32
    %51 = vector.broadcast %cst_25 : f32 to vector<8x1xf32>
    %52 = arith.divf %50, %51 : vector<8x1xf32>
    %cst_26 = arith.constant 9.99999974E-6 : f32
    %53 = vector.broadcast %cst_26 : f32 to vector<8x1xf32>
    %54 = arith.addf %52, %53 : vector<8x1xf32>
    %55 = math.rsqrt %54 : vector<8x1xf32>
    %56 = vector.broadcast %55 : vector<8x1xf32> to vector<8x32xf32>
    %57 = arith.mulf %47, %56 : vector<8x32xf32>
    %58 = tpu.concatenate %40, %57 in 1 : vector<8x32xf32>, vector<8x32xf32> -> vector<8x64xf32>
    %59 = vector.extract_strided_slice %0 {offsets = [2, 0], sizes = [1, 64], strides = [1, 1]} : vector<4x64xf32> to vector<1x64xf32>
    %60 = vector.broadcast %59 : vector<1x64xf32> to vector<8x64xf32>
    %61 = arith.mulf %58, %60 : vector<8x64xf32>
    %62 = vector.extract_strided_slice %0 {offsets = [3, 0], sizes = [1, 64], strides = [1, 1]} : vector<4x64xf32> to vector<1x64xf32>
    %63 = vector.broadcast %62 : vector<1x64xf32> to vector<8x64xf32>
    %64 = arith.addf %61, %63 : vector<8x64xf32>
    %c0_27 = arith.constant 0 : index
    %c0_28 = arith.constant 0 : index
    %65 = vector.load %arg6[%c0_27, %c0_28] : memref<64x32xbf16, #tpu.memory_space<vmem>>, vector<64x32xbf16>
    %66 = arith.truncf %64 : vector<8x64xf32> to vector<8x64xbf16>
    %cst_29 = arith.constant dense<0.000000e+00> : vector<8x32xf32>
    %67 = tpu.matmul %66, %65, %cst_29 {dimension_numbers = #tpu.dot_dimension_numbers<[1], [0], [0], [1], [0, 0, 1, 1], [], []>} : vector<8x64xbf16>, vector<64x32xbf16>, vector<8x32xf32> -> vector<8x32xf32>
    %68 = vector.extract_strided_slice %1 {offsets = [0, 0], sizes = [1, 32], strides = [1, 1]} : vector<7x32xf32> to vector<1x32xf32>
    %69 = vector.broadcast %68 : vector<1x32xf32> to vector<8x32xf32>
    %70 = arith.addf %67, %69 : vector<8x32xf32>
    %cst_30 = arith.constant 0.000000e+00 : f32
    %71 = vector.broadcast %cst_30 : f32 to vector<8x32xf32>
    %72 = arith.maximumf %70, %71 : vector<8x32xf32>
    %c0_31 = arith.constant 0 : index
    %c0_32 = arith.constant 0 : index
    %c0_33 = arith.constant 0 : index
    %73 = vector.load %arg7[%c0_31, %c0_32, %c0_33] : memref<6x32x32xbf16, #tpu.memory_space<vmem>>, vector<1x32x32xbf16>
    %74 = vector.shape_cast %73 : vector<1x32x32xbf16> to vector<32x32xbf16>
    %75 = arith.truncf %72 : vector<8x32xf32> to vector<8x32xbf16>
    %cst_34 = arith.constant dense<0.000000e+00> : vector<8x32xf32>
    %76 = tpu.matmul %75, %74, %cst_34 {dimension_numbers = #tpu.dot_dimension_numbers<[1], [0], [0], [1], [0, 0, 1, 1], [], []>} : vector<8x32xbf16>, vector<32x32xbf16>, vector<8x32xf32> -> vector<8x32xf32>
    %77 = vector.extract_strided_slice %1 {offsets = [1, 0], sizes = [1, 32], strides = [1, 1]} : vector<7x32xf32> to vector<1x32xf32>
    %78 = vector.broadcast %77 : vector<1x32xf32> to vector<8x32xf32>
    %79 = arith.addf %76, %78 : vector<8x32xf32>
    %cst_35 = arith.constant 0.000000e+00 : f32
    %80 = vector.broadcast %cst_35 : f32 to vector<8x32xf32>
    %81 = arith.maximumf %79, %80 : vector<8x32xf32>
    %c1 = arith.constant 1 : index
    %c0_36 = arith.constant 0 : index
    %c0_37 = arith.constant 0 : index
    %82 = vector.load %arg7[%c1, %c0_36, %c0_37] : memref<6x32x32xbf16, #tpu.memory_space<vmem>>, vector<1x32x32xbf16>
    %83 = vector.shape_cast %82 : vector<1x32x32xbf16> to vector<32x32xbf16>
    %84 = arith.truncf %81 : vector<8x32xf32> to vector<8x32xbf16>
    %cst_38 = arith.constant dense<0.000000e+00> : vector<8x32xf32>
    %85 = tpu.matmul %84, %83, %cst_38 {dimension_numbers = #tpu.dot_dimension_numbers<[1], [0], [0], [1], [0, 0, 1, 1], [], []>} : vector<8x32xbf16>, vector<32x32xbf16>, vector<8x32xf32> -> vector<8x32xf32>
    %86 = vector.extract_strided_slice %1 {offsets = [4, 0], sizes = [1, 32], strides = [1, 1]} : vector<7x32xf32> to vector<1x32xf32>
    %87 = vector.broadcast %86 : vector<1x32xf32> to vector<8x32xf32>
    %88 = arith.addf %85, %87 : vector<8x32xf32>
    %cst_39 = arith.constant 0.000000e+00 : f32
    %89 = vector.broadcast %cst_39 : f32 to vector<8x32xf32>
    %90 = arith.maximumf %88, %89 : vector<8x32xf32>
    %c2 = arith.constant 2 : index
    %c0_40 = arith.constant 0 : index
    %c0_41 = arith.constant 0 : index
    %91 = vector.load %arg7[%c2, %c0_40, %c0_41] : memref<6x32x32xbf16, #tpu.memory_space<vmem>>, vector<1x32x32xbf16>
    %92 = vector.shape_cast %91 : vector<1x32x32xbf16> to vector<32x32xbf16>
    %93 = arith.truncf %90 : vector<8x32xf32> to vector<8x32xbf16>
    %cst_42 = arith.constant dense<0.000000e+00> : vector<8x32xf32>
    %94 = tpu.matmul %93, %92, %cst_42 {dimension_numbers = #tpu.dot_dimension_numbers<[1], [0], [0], [1], [0, 0, 1, 1], [], []>} : vector<8x32xbf16>, vector<32x32xbf16>, vector<8x32xf32> -> vector<8x32xf32>
    %95 = vector.extract_strided_slice %1 {offsets = [2, 0], sizes = [1, 32], strides = [1, 1]} : vector<7x32xf32> to vector<1x32xf32>
    %96 = vector.broadcast %95 : vector<1x32xf32> to vector<8x32xf32>
    %97 = arith.addf %94, %96 : vector<8x32xf32>
    %cst_43 = arith.constant 0.000000e+00 : f32
    %98 = vector.broadcast %cst_43 : f32 to vector<8x32xf32>
    %99 = arith.maximumf %97, %98 : vector<8x32xf32>
    %c3 = arith.constant 3 : index
    %c0_44 = arith.constant 0 : index
    %c0_45 = arith.constant 0 : index
    %100 = vector.load %arg7[%c3, %c0_44, %c0_45] : memref<6x32x32xbf16, #tpu.memory_space<vmem>>, vector<1x32x32xbf16>
    %101 = vector.shape_cast %100 : vector<1x32x32xbf16> to vector<32x32xbf16>
    %102 = arith.truncf %99 : vector<8x32xf32> to vector<8x32xbf16>
    %cst_46 = arith.constant dense<0.000000e+00> : vector<8x32xf32>
    %103 = tpu.matmul %102, %101, %cst_46 {dimension_numbers = #tpu.dot_dimension_numbers<[1], [0], [0], [1], [0, 0, 1, 1], [], []>} : vector<8x32xbf16>, vector<32x32xbf16>, vector<8x32xf32> -> vector<8x32xf32>
    %104 = vector.extract_strided_slice %1 {offsets = [5, 0], sizes = [1, 32], strides = [1, 1]} : vector<7x32xf32> to vector<1x32xf32>
    %105 = vector.broadcast %104 : vector<1x32xf32> to vector<8x32xf32>
    %106 = arith.addf %103, %105 : vector<8x32xf32>
    %cst_47 = arith.constant 0.000000e+00 : f32
    %107 = vector.broadcast %cst_47 : f32 to vector<8x32xf32>
    %108 = arith.maximumf %106, %107 : vector<8x32xf32>
    %c4 = arith.constant 4 : index
    %c0_48 = arith.constant 0 : index
    %c0_49 = arith.constant 0 : index
    %109 = vector.load %arg7[%c4, %c0_48, %c0_49] : memref<6x32x32xbf16, #tpu.memory_space<vmem>>, vector<1x32x32xbf16>
    %110 = vector.shape_cast %109 : vector<1x32x32xbf16> to vector<32x32xbf16>
    %111 = arith.truncf %108 : vector<8x32xf32> to vector<8x32xbf16>
    %cst_50 = arith.constant dense<0.000000e+00> : vector<8x32xf32>
    %112 = tpu.matmul %111, %110, %cst_50 {dimension_numbers = #tpu.dot_dimension_numbers<[1], [0], [0], [1], [0, 0, 1, 1], [], []>} : vector<8x32xbf16>, vector<32x32xbf16>, vector<8x32xf32> -> vector<8x32xf32>
    %113 = vector.extract_strided_slice %1 {offsets = [3, 0], sizes = [1, 32], strides = [1, 1]} : vector<7x32xf32> to vector<1x32xf32>
    %114 = vector.broadcast %113 : vector<1x32xf32> to vector<8x32xf32>
    %115 = arith.addf %112, %114 : vector<8x32xf32>
    %cst_51 = arith.constant 0.000000e+00 : f32
    %116 = vector.broadcast %cst_51 : f32 to vector<8x32xf32>
    %117 = arith.maximumf %115, %116 : vector<8x32xf32>
    %c5 = arith.constant 5 : index
    %c0_52 = arith.constant 0 : index
    %c0_53 = arith.constant 0 : index
    %118 = vector.load %arg7[%c5, %c0_52, %c0_53] : memref<6x32x32xbf16, #tpu.memory_space<vmem>>, vector<1x32x32xbf16>
    %119 = vector.shape_cast %118 : vector<1x32x32xbf16> to vector<32x32xbf16>
    %120 = arith.truncf %117 : vector<8x32xf32> to vector<8x32xbf16>
    %cst_54 = arith.constant dense<0.000000e+00> : vector<8x32xf32>
    %121 = tpu.matmul %120, %119, %cst_54 {dimension_numbers = #tpu.dot_dimension_numbers<[1], [0], [0], [1], [0, 0, 1, 1], [], []>} : vector<8x32xbf16>, vector<32x32xbf16>, vector<8x32xf32> -> vector<8x32xf32>
    %122 = vector.extract_strided_slice %1 {offsets = [6, 0], sizes = [1, 32], strides = [1, 1]} : vector<7x32xf32> to vector<1x32xf32>
    %123 = vector.broadcast %122 : vector<1x32xf32> to vector<8x32xf32>
    %124 = arith.addf %121, %123 : vector<8x32xf32>
    %cst_55 = arith.constant 0.000000e+00 : f32
    %125 = vector.broadcast %cst_55 : f32 to vector<8x32xf32>
    %126 = arith.maximumf %124, %125 : vector<8x32xf32>
    %127 = tpu.concatenate %72, %90, %108, %126 in 1 : vector<8x32xf32>, vector<8x32xf32>, vector<8x32xf32>, vector<8x32xf32> -> vector<8x128xf32>
    %c0_56 = arith.constant 0 : index
    %c0_57 = arith.constant 0 : index
    %128 = vector.load %arg10[%c0_56, %c0_57] : memref<8x128xf32, #tpu.memory_space<vmem>>, vector<8x128xf32>
    tpu.vector_store %arg10[%c0_56, %c0_57], %127 {strides = array<i32>} : memref<8x128xf32, #tpu.memory_space<vmem>>, vector<8x128xf32>,
    return
  }
  func.func @transform_0(%arg0: i32) -> (i32, i32) {
    %c0_i32 = arith.constant 0 : i32
    %c0_i32_0 = arith.constant 0 : i32
    return %arg0, %c0_i32 : i32, i32
  }
  func.func @transform_1(%arg0: i32) -> (i32, i32) {
    %c0_i32 = arith.constant 0 : i32
    %c0_i32_0 = arith.constant 0 : i32
    %c0_i32_1 = arith.constant 0 : i32
    return %c0_i32, %c0_i32_0 : i32, i32
  }
  func.func @transform_2(%arg0: i32) -> (i32, i32) {
    %c0_i32 = arith.constant 0 : i32
    %c0_i32_0 = arith.constant 0 : i32
    %c0_i32_1 = arith.constant 0 : i32
    return %c0_i32, %c0_i32_0 : i32, i32
  }
  func.func @transform_3(%arg0: i32) -> (i32, i32) {
    %c0_i32 = arith.constant 0 : i32
    %c0_i32_0 = arith.constant 0 : i32
    %c0_i32_1 = arith.constant 0 : i32
    return %c0_i32, %c0_i32_0 : i32, i32
  }
  func.func @transform_4(%arg0: i32) -> (i32, i32) {
    %c0_i32 = arith.constant 0 : i32
    %c0_i32_0 = arith.constant 0 : i32
    %c0_i32_1 = arith.constant 0 : i32
    return %c0_i32, %c0_i32_0 : i32, i32
  }
  func.func @transform_5(%arg0: i32) -> (i32, i32) {
    %c0_i32 = arith.constant 0 : i32
    %c0_i32_0 = arith.constant 0 : i32
    %c0_i32_1 = arith.constant 0 : i32
    return %c0_i32, %c0_i32_0 : i32, i32
  }
  func.func @transform_6(%arg0: i32) -> (i32, i32, i32) {
    %c0_i32 = arith.constant 0 : i32
    %c0_i32_0 = arith.constant 0 : i32
    %c0_i32_1 = arith.constant 0 : i32
    %c0_i32_2 = arith.constant 0 : i32
    return %c0_i32, %c0_i32_0, %c0_i32_1 : i32, i32, i32
  }
  func.func @transform_7(%arg0: i32) -> (i32, i32) {
    %c0_i32 = arith.constant 0 : i32
    %c0_i32_0 = arith.constant 0 : i32
    %c0_i32_1 = arith.constant 0 : i32
    return %c0_i32, %c0_i32_0 : i32, i32
  }
  func.func @transform_8(%arg0: i32) -> (i32, i32) {
    %c0_i32 = arith.constant 0 : i32
    %c0_i32_0 = arith.constant 0 : i32
    %c0_i32_1 = arith.constant 0 : i32
    return %c0_i32, %c0_i32_0 : i32, i32
  }
  func.func @transform_9(%arg0: i32) -> (i32, i32) {
    %c0_i32 = arith.constant 0 : i32
    %c0_i32_0 = arith.constant 0 : i32
    return %arg0, %c0_i32 : i32, i32
  }
}

</mosaic_0001>

<llo_original>
// kernel: fingerprint_formula_encoder.1
$region0: #{fingerprint_formula_encoder.1}
  #allocation0 [shape = 'u32[]', space=smem, size = 0x4, offset = 0x4, fixed_abs, tag = 'smem constant byte address 0x4 - core index']
  #allocation1 [shape = 'u32[144,128]{1,0:T(1,128)}', space=vmem, size = 0x12000, scoped, tag = 'internal scratch']
  %s0 = inlined_call_operand.vmem [shape: bf16[8,58], index: 0, kind: input, shape index: {}]
  %s1 = inlined_call_operand.vmem [shape: bf16[58,96], index: 1, kind: input, shape index: {}]
  %s2 = inlined_call_operand.vmem [shape: f32[1,96], index: 2, kind: input, shape index: {}]
  %s3 = inlined_call_operand.vmem [shape: bf16[96,64], index: 3, kind: input, shape index: {}]
  %s4 = inlined_call_operand.vmem [shape: bf16[64,64], index: 4, kind: input, shape index: {}]
  %s5 = inlined_call_operand.vmem [shape: bf16[64,32], index: 5, kind: input, shape index: {}]
  %s6 = inlined_call_operand.vmem [shape: bf16[6,32,32], index: 6, kind: input, shape index: {}]
  %s7 = inlined_call_operand.hbm [shape: f32[4,64], index: 7, kind: input, shape index: {}]
  %s8 = inlined_call_operand.hbm [shape: f32[7,32], index: 8, kind: input, shape index: {}]
  %s9 = inlined_call_operand.vmem [shape: f32[8,128], index: 9, kind: output, shape index: {}]
  %s10 = sld [smem:[#allocation0]]
  $region54: #{fingerprint_formula_encoder.1} parent=0
    _
  %s12 = ssub.s32 1, %s10
  %s13 = scalar_select 0, %s12, %s10
  $region1: #{fingerprint_formula_encoder.1} parent=0
    #allocation2 [shape = 'u8[2048]{0}', space=vmem, size = 0x800, scoped, tag = 'input window, operand 7, single buffered']
    #allocation3 [shape = 's32[1]{0}', space=sflag, size = 0x4, scoped, tag = 'scoped memory for fingerprint_formula_encoder.1']
    #allocation4 [shape = 'u8[4096]{0}', space=vmem, size = 0x1000, scoped, tag = 'input window, operand 8, single buffered']
    #allocation5 [shape = 's32[1]{0}', space=sflag, size = 0x4, scoped, tag = 'scoped memory for fingerprint_formula_encoder.1']
    %14 = vsyncpa [#allocation3], 0
    %15 = vsyncpa [#allocation5], 0
    // Predicated region
    $region2: #{fingerprint_formula_encoder.1} parent=1 // pred_check
      _
    $region3: #{fingerprint_formula_encoder.1} parent=1 // pred_check_branch
      %17 = sbr.rel (0) target = $region5
    $region4: #{fingerprint_formula_encoder.1} parent=1 // pred_region
      _
    $region5: #{fingerprint_formula_encoder.1} parent=1 // pred_fallthru
      _
    // Predicated region
    $region6: #{fingerprint_formula_encoder.1} parent=1 // pred_check
      _
    $region7: #{fingerprint_formula_encoder.1} parent=1 // pred_check_branch
      %19 = sbr.rel (0) target = $region9
    $region8: #{fingerprint_formula_encoder.1} parent=1 // pred_region
      _
    $region9: #{fingerprint_formula_encoder.1} parent=1 // pred_fallthru
      _
    // Predicated region
    $region10: #{fingerprint_formula_encoder.1} parent=1 // pred_check
      _
    $region11: #{fingerprint_formula_encoder.1} parent=1 // pred_check_branch
      %21 = sbr.rel (0) target = $region13
    $region12: #{fingerprint_formula_encoder.1} parent=1 // pred_region
      _
    $region13: #{fingerprint_formula_encoder.1} parent=1 // pred_fallthru
      _
    // Predicated region
    $region14: #{fingerprint_formula_encoder.1} parent=1 // pred_check
      _
    $region15: #{fingerprint_formula_encoder.1} parent=1 // pred_check_branch
      %23 = sbr.rel (0) target = $region17
    $region16: #{fingerprint_formula_encoder.1} parent=1 // pred_region
      _
    $region17: #{fingerprint_formula_encoder.1} parent=1 // pred_fallthru
      _
    // Predicated region
    $region18: #{fingerprint_formula_encoder.1} parent=1 // pred_check
      _
    $region19: #{fingerprint_formula_encoder.1} parent=1 // pred_check_branch
      %25 = sbr.rel (0) target = $region21
    $region20: #{fingerprint_formula_encoder.1} parent=1 // pred_region
      _
    $region21: #{fingerprint_formula_encoder.1} parent=1 // pred_fallthru
      _
    // Predicated region
    $region22: #{fingerprint_formula_encoder.1} parent=1 // pred_check
      _
    $region23: #{fingerprint_formula_encoder.1} parent=1 // pred_check_branch
      %27 = sbr.rel (0) target = $region25
    $region24: #{fingerprint_formula_encoder.1} parent=1 // pred_region
      _
    $region25: #{fingerprint_formula_encoder.1} parent=1 // pred_fallthru
      _
    // Predicated region
    $region26: #{fingerprint_formula_encoder.1} parent=1 // pred_check
      _
    $region27: #{fingerprint_formula_encoder.1} parent=1 // pred_check_branch
      %29 = sbr.rel (0) target = $region29
    $region28: #{fingerprint_formula_encoder.1} parent=1 // pred_region
      _
    $region29: #{fingerprint_formula_encoder.1} parent=1 // pred_fallthru
      _
    // Predicated region
    $region30: #{fingerprint_formula_encoder.1} parent=1 // pred_check
      _
    $region31: #{fingerprint_formula_encoder.1} parent=1 // pred_check_branch
      %31 = sbr.rel (0) target = $region33
    $region32: #{fingerprint_formula_encoder.1} parent=1 // pred_region
      %s33 = ssub.s32 64, 64
      %34 = vsyncadd [#allocation3], %s33
      %s36 = sshll.u32 [#allocation2], 4
      %s37 = int_to_ptr.vmem [resolvable:$true] %s36
      %39 = dma.hbm_to_vmem [thread:$0]  %s7, 64, %s37, [#allocation3]
    $region33: #{fingerprint_formula_encoder.1} parent=1 // pred_fallthru
      _
    // Predicated region
    $region34: #{fingerprint_formula_encoder.1} parent=1 // pred_check
      _
    $region35: #{fingerprint_formula_encoder.1} parent=1 // pred_check_branch
      %41 = sbr.rel (0) target = $region37
    $region36: #{fingerprint_formula_encoder.1} parent=1 // pred_region
      %s43 = ssub.s32 128, 128
      %44 = vsyncadd [#allocation5], %s43
      %s46 = sshll.u32 [#allocation4], 4
      %s47 = int_to_ptr.vmem [resolvable:$true] %s46
      %49 = dma.hbm_to_vmem [thread:$0]  %s8, 128, %s47, [#allocation5]
    $region37: #{fingerprint_formula_encoder.1} parent=1 // pred_fallthru
      _
    // Predicated region
    $region38: #{fingerprint_formula_encoder.1} parent=1 // pred_check
      _
    $region39: #{fingerprint_formula_encoder.1} parent=1 // pred_check_branch
      %51 = sbr.rel (0) target = $region41
    $region40: #{fingerprint_formula_encoder.1} parent=1 // pred_region
      %52 = dma.done [#allocation3], 64
    $region41: #{fingerprint_formula_encoder.1} parent=1 // pred_fallthru
      _
    // Predicated region
    $region42: #{fingerprint_formula_encoder.1} parent=1 // pred_check
      _
    $region43: #{fingerprint_formula_encoder.1} parent=1 // pred_check_branch
      %54 = sbr.rel (0) target = $region45
    $region44: #{fingerprint_formula_encoder.1} parent=1 // pred_region
      %55 = dma.done [#allocation5], 128
    $region45: #{fingerprint_formula_encoder.1} parent=1 // pred_fallthru
      _
    %v57 = vld [vmem:[#allocation2] sm:$0xf]
    %v58 = vld [vmem:[#allocation4] sm:$0x7f]
    %v59 = vld [vmem:[%s0] sm:$0xf]
    %v60 = vld [vmem:[%s1] sm:$0xf]
    %v61 = vld [vmem:[%s1 + $0x4] sm:$0xf]
    %v62 = vld [vmem:[%s1 + $0x8] sm:$0xf]
    %v63 = vld [vmem:[%s1 + $0xc] sm:$0xf]
    %v64 = vld [vmem:[%s1 + $0x10] sm:$0xf]
    %v65 = vld [vmem:[%s1 + $0x14] sm:$0xf]
    %v66 = vld [vmem:[%s1 + $0x18] sm:$0xf]
    %v67 = vld [vmem:[%s1 + $0x1c] sm:$0x1]
    %v68 = vld [vmem:[%s2] sm:$0x1]
    %v70 = vlaneseq
    %v71 = vshrl.u32 %v70, 7
    %v72 = vsub.s32 0, %v71
    %v73 = vrot.slane %v68, %v72
    %v83 = vunpack.c.l.b16 %v60
    %v84 = vunpack.c.l.b16 %v61
    %v85 = vunpack.c.l.b16 %v62
    %v86 = vunpack.c.l.b16 %v63
    %v87 = vunpack.c.l.b16 %v64
    %v88 = vunpack.c.l.b16 %v65
    %v89 = vunpack.c.l.b16 %v66
    %v90 = vunpack.c.l.b16 %v67
    %v91 = vpack.c.b16 %v84, %v83
    %v92 = vpack.c.b16 %v86, %v85
    %v93 = vpack.c.b16 %v88, %v87
    %v94 = vpack.c.b16 %v90, %v89
    %vm98 = vcmask 474112
    %v100 = vsel %vm98, %v59, 0
    %vm102 = vcmask 1044480
    %v104 = vsel %vm102, %v94, 0
    %106 = vmatprep.subr.bf16.mxu0 0
    %107 = vmatpush1.bf16.msra.mxu0 %v91
    %108 = vmatprep.subr.bf16.mxu0 0
    %109 = vmatpush1.bf16.msra.mxu0 %v92
    %110 = vmatprep.subr.bf16.mxu0 0
    %111 = vmatpush1.bf16.msra.mxu0 %v93
    %112 = vmatprep.subr.bf16.mxu0 0
    %113 = vmatpush1.bf16.msra.mxu0 %v104
    %114 = vmatprep.subr.bf16.mxu0 0
    %115 = vmatpush1.bf16.msra.mxu0 0
    %116 = vmatprep.subr.bf16.mxu0 0
    %117 = vmatpush1.bf16.msra.mxu0 0
    %118 = vmatprep.subr.bf16.mxu0 0
    %119 = vmatpush1.bf16.msra.mxu0 0
    %120 = vmatprep.subr.bf16.mxu0 0
    %121 = vmatpush1.bf16.msra.mxu0 0
    %122 = vmatprep.subr.bf16.mxu0 0
    %123 = vmatpush1.bf16.msra.mxu0 0
    %124 = vmatprep.subr.bf16.mxu0 0
    %125 = vmatpush1.bf16.msra.mxu0 0
    %126 = vmatprep.subr.bf16.mxu0 0
    %127 = vmatpush1.bf16.msra.mxu0 0
    %128 = vmatprep.subr.bf16.mxu0 0
    %129 = vmatpush1.bf16.msra.mxu0 0
    %130 = vmatprep.subr.bf16.mxu0 0
    %131 = vmatpush1.bf16.msra.mxu0 0
    %132 = vmatprep.subr.bf16.mxu0 0
    %133 = vmatpush1.bf16.msra.mxu0 0
    %134 = vmatprep.subr.bf16.mxu0 0
    %135 = vmatpush1.bf16.msra.mxu0 0
    %136 = vmatprep.subr.bf16.mxu0 0
    %137 = vmatpush1.bf16.msra.mxu0 0
    %138 = vmatprep.mubr.bf16.mxu0 0
    %139 = vmatmul.mubr.bf16.gmra.mrb[0].mxu0 %v100
    %v140 = vpop.f32.mrb[0].mxu0
    %v141 = vadd.f32 %v73, %v140
    %v142 = vpop.f32.mrb[0].mxu0
    %v143 = vpop.f32.mrb[0].mxu0
    %v144 = vpop.f32.mrb[0].mxu0
    %145 = vdwg.mxu0
    %v146 = vmax.f32 %v141, 0.0
    %v147 = vld [vmem:[%s3] sm:$0xf]
    %v148 = vld [vmem:[%s3 + $0x4] sm:$0xf]
    %v149 = vld [vmem:[%s3 + $0x8] sm:$0xf]
    %v150 = vld [vmem:[%s3 + $0xc] sm:$0xf]
    %v151 = vld [vmem:[%s3 + $0x10] sm:$0xf]
    %v152 = vld [vmem:[%s3 + $0x14] sm:$0xf]
    %v153 = vld [vmem:[%s3 + $0x18] sm:$0xf]
    %v154 = vld [vmem:[%s3 + $0x1c] sm:$0xf]
    %v155 = vld [vmem:[%s3 + $0x20] sm:$0xf]
    %v156 = vld [vmem:[%s3 + $0x24] sm:$0xf]
    %v157 = vld [vmem:[%s3 + $0x28] sm:$0xf]
    %v158 = vld [vmem:[%s3 + $0x2c] sm:$0xf]
    %v159 = vpack.c.bf16 %v146, %v146
    %v160 = vlaneseq
    %v161 = vshrl.u32 %v160, 7
    %v162 = vsub.s32 0, %v161
    %v163 = vrot.slane %v57, %v162
    %v176 = vunpack.c.l.b16 %v147
    %v177 = vunpack.c.l.b16 %v148
    %v178 = vunpack.c.l.b16 %v149
    %v179 = vunpack.c.l.b16 %v150
    %v180 = vunpack.c.l.b16 %v151
    %v181 = vunpack.c.l.b16 %v152
    %v182 = vunpack.c.l.b16 %v153
    %v183 = vunpack.c.l.b16 %v154
    %v184 = vunpack.c.l.b16 %v155
    %v185 = vunpack.c.l.b16 %v156
    %v186 = vunpack.c.l.b16 %v157
    %v187 = vunpack.c.l.b16 %v158
    %v188 = vpack.c.b16 %v177, %v176
    %v189 = vpack.c.b16 %v179, %v178
    %v190 = vpack.c.b16 %v181, %v180
    %v191 = vpack.c.b16 %v183, %v182
    %v192 = vpack.c.b16 %v185, %v184
    %v193 = vpack.c.b16 %v187, %v186
    %vm200 = vcmask 785408
    %v202 = vsel %vm200, %v159, 0
    %204 = vmatprep.subr.bf16.mxu0 0
    %205 = vmatpush1.bf16.msra.mxu0 %v188
    %206 = vmatprep.subr.bf16.mxu0 0
    %207 = vmatpush1.bf16.msra.mxu0 %v189
    %208 = vmatprep.subr.bf16.mxu0 0
    %209 = vmatpush1.bf16.msra.mxu0 %v190
    %210 = vmatprep.subr.bf16.mxu0 0
    %211 = vmatpush1.bf16.msra.mxu0 %v191
    %212 = vmatprep.subr.bf16.mxu0 0
    %213 = vmatpush1.bf16.msra.mxu0 %v192
    %214 = vmatprep.subr.bf16.mxu0 0
    %215 = vmatpush1.bf16.msra.mxu0 %v193
    %216 = vmatprep.subr.bf16.mxu0 0
    %217 = vmatpush1.bf16.msra.mxu0 0
    %218 = vmatprep.subr.bf16.mxu0 0
    %219 = vmatpush1.bf16.msra.mxu0 0
    %220 = vmatprep.subr.bf16.mxu0 0
    %221 = vmatpush1.bf16.msra.mxu0 0
    %222 = vmatprep.subr.bf16.mxu0 0
    %223 = vmatpush1.bf16.msra.mxu0 0
    %224 = vmatprep.subr.bf16.mxu0 0
    %225 = vmatpush1.bf16.msra.mxu0 0
    %226 = vmatprep.subr.bf16.mxu0 0
    %227 = vmatpush1.bf16.msra.mxu0 0
    %228 = vmatprep.subr.bf16.mxu0 0
    %229 = vmatpush1.bf16.msra.mxu0 0
    %230 = vmatprep.subr.bf16.mxu0 0
    %231 = vmatpush1.bf16.msra.mxu0 0
    %232 = vmatprep.subr.bf16.mxu0 0
    %233 = vmatpush1.bf16.msra.mxu0 0
    %234 = vmatprep.subr.bf16.mxu0 0
    %235 = vmatpush1.bf16.msra.mxu0 0
    %236 = vmatprep.mubr.bf16.mxu0 0
    %237 = vmatmul.mubr.bf16.gmra.mrb[0].mxu0 %v202
    %v238 = vpop.f32.mrb[0].mxu0
    %v239 = vadd.f32 %v163, %v238
    %v240 = vpop.f32.mrb[0].mxu0
    %v241 = vpop.f32.mrb[0].mxu0
    %v242 = vpop.f32.mrb[0].mxu0
    %243 = vdwg.mxu0
    %v244 = vmax.f32 %v239, 0.0
    %v245 = vld [vmem:[%s4] sm:$0xf]
    %v246 = vld [vmem:[%s4 + $0x4] sm:$0xf]
    %v247 = vld [vmem:[%s4 + $0x8] sm:$0xf]
    %v248 = vld [vmem:[%s4 + $0xc] sm:$0xf]
    %v249 = vld [vmem:[%s4 + $0x10] sm:$0xf]
    %v250 = vld [vmem:[%s4 + $0x14] sm:$0xf]
    %v251 = vld [vmem:[%s4 + $0x18] sm:$0xf]
    %v252 = vld [vmem:[%s4 + $0x1c] sm:$0xf]
    %v253 = vpack.c.bf16 %v244, %v244
    %v254 = vlaneseq
    %v255 = vshrl.u32 %v254, 7
    %v256 = vsub.s32 1, %v255
    %v257 = vrot.slane %v57, %v256
    %v266 = vunpack.c.l.b16 %v245
    %v267 = vunpack.c.l.b16 %v246
    %v268 = vunpack.c.l.b16 %v247
    %v269 = vunpack.c.l.b16 %v248
    %v270 = vunpack.c.l.b16 %v249
    %v271 = vunpack.c.l.b16 %v250
    %v272 = vunpack.c.l.b16 %v251
    %v273 = vunpack.c.l.b16 %v252
    %v274 = vpack.c.b16 %v267, %v266
    %v275 = vpack.c.b16 %v269, %v268
    %v276 = vpack.c.b16 %v271, %v270
    %v277 = vpack.c.b16 %v273, %v272
    %vm282 = vcmask 523264
    %v284 = vsel %vm282, %v253, 0
    %286 = vmatprep.subr.bf16.mxu0 0
    %287 = vmatpush1.bf16.msra.mxu0 %v274
    %288 = vmatprep.subr.bf16.mxu0 0
    %289 = vmatpush1.bf16.msra.mxu0 %v275
    %290 = vmatprep.subr.bf16.mxu0 0
    %291 = vmatpush1.bf16.msra.mxu0 %v276
    %292 = vmatprep.subr.bf16.mxu0 0
    %293 = vmatpush1.bf16.msra.mxu0 %v277
    %294 = vmatprep.subr.bf16.mxu0 0
    %295 = vmatpush1.bf16.msra.mxu0 0
    %296 = vmatprep.subr.bf16.mxu0 0
    %297 = vmatpush1.bf16.msra.mxu0 0
    %298 = vmatprep.subr.bf16.mxu0 0
    %299 = vmatpush1.bf16.msra.mxu0 0
    %300 = vmatprep.subr.bf16.mxu0 0
    %301 = vmatpush1.bf16.msra.mxu0 0
    %302 = vmatprep.subr.bf16.mxu0 0
    %303 = vmatpush1.bf16.msra.mxu0 0
    %304 = vmatprep.subr.bf16.mxu0 0
    %305 = vmatpush1.bf16.msra.mxu0 0
    %306 = vmatprep.subr.bf16.mxu0 0
    %307 = vmatpush1.bf16.msra.mxu0 0
    %308 = vmatprep.subr.bf16.mxu0 0
    %309 = vmatpush1.bf16.msra.mxu0 0
    %310 = vmatprep.subr.bf16.mxu0 0
    %311 = vmatpush1.bf16.msra.mxu0 0
    %312 = vmatprep.subr.bf16.mxu0 0
    %313 = vmatpush1.bf16.msra.mxu0 0
    %314 = vmatprep.subr.bf16.mxu0 0
    %315 = vmatpush1.bf16.msra.mxu0 0
    %316 = vmatprep.subr.bf16.mxu0 0
    %317 = vmatpush1.bf16.msra.mxu0 0
    %318 = vmatprep.mubr.bf16.mxu0 0
    %319 = vmatmul.mubr.bf16.gmra.mrb[0].mxu0 %v284
    %v320 = vpop.f32.mrb[0].mxu0
    %v321 = vadd.f32 %v257, %v320
    %v322 = vpop.f32.mrb[0].mxu0
    %v323 = vpop.f32.mrb[0].mxu0
    %v324 = vpop.f32.mrb[0].mxu0
    %325 = vdwg.mxu0
    %vm326 = vcmask 261120
    %v327 = vsel %vm326, %v321, 0.0
    %328 = vadd.xlane.f32.xlu0 %v327
    %v329 = vpop.xlane.xlu0 %328
    %v330 = vrcp.pop 32.0
    %v331 = vmul.f32 %v329, %v330
    %v332 = vsub.f32 %v321, %v331
    %v333 = vmul.f32 %v332, %v332
    %v334 = vsel %vm326, %v333, 0.0
    %335 = vadd.xlane.f32.xlu0 %v334
    %v336 = vpop.xlane.xlu0 %335
    %v337 = vmul.f32 %v336, %v330
    %v338 = vadd.f32 %v337, 1e-05
    %v339 = vrsqrt.pop %v338
    %v340 = vmul.f32 %v332, %v339
    %342 = vrot.lane.b32.xlu0 %v321, 96
    %v343 = vpop.permute.xlu0 %342
    %v345 = vsel %vm326, %v343, 0.0
    %346 = vadd.xlane.f32.xlu0 %v345
    %v347 = vpop.xlane.xlu0 %346
    %v348 = vmul.f32 %v347, %v330
    %v349 = vsub.f32 %v321, %v348
    %v350 = vmul.f32 %v349, %v349
    %352 = vrot.lane.b32.xlu0 %v350, 96
    %v353 = vpop.permute.xlu0 %352
    %v355 = vsel %vm326, %v353, 0.0
    %356 = vadd.xlane.f32.xlu0 %v355
    %v357 = vpop.xlane.xlu0 %356
    %v358 = vmul.f32 %v357, %v330
    %v359 = vadd.f32 %v358, 1e-05
    %v360 = vrsqrt.pop %v359
    %v361 = vmul.f32 %v349, %v360
    %v362 = vsel %vm326, %v340, %v361
    %v363 = vlaneseq
    %v364 = vshrl.u32 %v363, 7
    %v365 = vsub.s32 2, %v364
    %v366 = vrot.slane %v57, %v365
    %v367 = vmul.f32 %v362, %v366
    %v368 = vlaneseq
    %v369 = vshrl.u32 %v368, 7
    %v370 = vsub.s32 3, %v369
    %v371 = vrot.slane %v57, %v370
    %v372 = vadd.f32 %v367, %v371
    %v373 = vld [vmem:[%s5] sm:$0xf]
    %v374 = vld [vmem:[%s5 + $0x4] sm:$0xf]
    %v375 = vld [vmem:[%s5 + $0x8] sm:$0xf]
    %v376 = vld [vmem:[%s5 + $0xc] sm:$0xf]
    %v377 = vld [vmem:[%s5 + $0x10] sm:$0xf]
    %v378 = vld [vmem:[%s5 + $0x14] sm:$0xf]
    %v379 = vld [vmem:[%s5 + $0x18] sm:$0xf]
    %v380 = vld [vmem:[%s5 + $0x1c] sm:$0xf]
    %v381 = vpack.c.bf16 %v372, %v372
    %v382 = vlaneseq
    %v383 = vshrl.u32 %v382, 7
    %v384 = vsub.s32 0, %v383
    %v385 = vrot.slane %v58, %v384
    %v394 = vunpack.c.l.b16 %v373
    %v395 = vunpack.c.l.b16 %v374
    %v396 = vunpack.c.l.b16 %v375
    %v397 = vunpack.c.l.b16 %v376
    %v398 = vunpack.c.l.b16 %v377
    %v399 = vunpack.c.l.b16 %v378
    %v400 = vunpack.c.l.b16 %v379
    %v401 = vunpack.c.l.b16 %v380
    %v402 = vpack.c.b16 %v395, %v394
    %v403 = vpack.c.b16 %v397, %v396
    %v404 = vpack.c.b16 %v399, %v398
    %v405 = vpack.c.b16 %v401, %v400
    %v411 = vsel %vm282, %v381, 0
    %413 = vmatprep.subr.bf16.mxu0 0
    %414 = vmatpush1.bf16.msra.mxu0 %v402
    %415 = vmatprep.subr.bf16.mxu0 0
    %416 = vmatpush1.bf16.msra.mxu0 %v403
    %417 = vmatprep.subr.bf16.mxu0 0
    %418 = vmatpush1.bf16.msra.mxu0 %v404
    %419 = vmatprep.subr.bf16.mxu0 0
    %420 = vmatpush1.bf16.msra.mxu0 %v405
    %421 = vmatprep.subr.bf16.mxu0 0
    %422 = vmatpush1.bf16.msra.mxu0 0
    %423 = vmatprep.subr.bf16.mxu0 0
    %424 = vmatpush1.bf16.msra.mxu0 0
    %425 = vmatprep.subr.bf16.mxu0 0
    %426 = vmatpush1.bf16.msra.mxu0 0
    %427 = vmatprep.subr.bf16.mxu0 0
    %428 = vmatpush1.bf16.msra.mxu0 0
    %429 = vmatprep.subr.bf16.mxu0 0
    %430 = vmatpush1.bf16.msra.mxu0 0
    %431 = vmatprep.subr.bf16.mxu0 0
    %432 = vmatpush1.bf16.msra.mxu0 0
    %433 = vmatprep.subr.bf16.mxu0 0
    %434 = vmatpush1.bf16.msra.mxu0 0
    %435 = vmatprep.subr.bf16.mxu0 0
    %436 = vmatpush1.bf16.msra.mxu0 0
    %437 = vmatprep.subr.bf16.mxu0 0
    %438 = vmatpush1.bf16.msra.mxu0 0
    %439 = vmatprep.subr.bf16.mxu0 0
    %440 = vmatpush1.bf16.msra.mxu0 0
    %441 = vmatprep.subr.bf16.mxu0 0
    %442 = vmatpush1.bf16.msra.mxu0 0
    %443 = vmatprep.subr.bf16.mxu0 0
    %444 = vmatpush1.bf16.msra.mxu0 0
    %445 = vmatprep.mubr.bf16.mxu0 0
    %446 = vmatmul.mubr.bf16.gmra.mrb[0].mxu0 %v411
    %v447 = vpop.f32.mrb[0].mxu0
    %v448 = vadd.f32 %v385, %v447
    %v449 = vpop.f32.mrb[0].mxu0
    %v450 = vpop.f32.mrb[0].mxu0
    %v451 = vpop.f32.mrb[0].mxu0
    %452 = vdwg.mxu0
    %v453 = vmax.f32 %v448, 0.0
    %v454 = vld [vmem:[%s6] sm:$0xf]
    %v455 = vld [vmem:[%s6 + $0x4] sm:$0xf]
    %v456 = vld [vmem:[%s6 + $0x8] sm:$0xf]
    %v457 = vld [vmem:[%s6 + $0xc] sm:$0xf]
    %v458 = vpack.c.bf16 %v453, %v453
    %v459 = vlaneseq
    %v460 = vshrl.u32 %v459, 7
    %v461 = vsub.s32 1, %v460
    %v462 = vrot.slane %v58, %v461
    %v467 = vunpack.c.l.b16 %v454
    %v468 = vunpack.c.l.b16 %v455
    %v469 = vunpack.c.l.b16 %v456
    %v470 = vunpack.c.l.b16 %v457
    %v471 = vpack.c.b16 %v468, %v467
    %v472 = vpack.c.b16 %v470, %v469
    %v476 = vsel %vm326, %v458, 0
    %478 = vmatprep.subr.bf16.mxu0 0
    %479 = vmatpush1.bf16.msra.mxu0 %v471
    %480 = vmatprep.subr.bf16.mxu0 0
    %481 = vmatpush1.bf16.msra.mxu0 %v472
    %482 = vmatprep.subr.bf16.mxu0 0
    %483 = vmatpush1.bf16.msra.mxu0 0
    %484 = vmatprep.subr.bf16.mxu0 0
    %485 = vmatpush1.bf16.msra.mxu0 0
    %486 = vmatprep.subr.bf16.mxu0 0
    %487 = vmatpush1.bf16.msra.mxu0 0
    %488 = vmatprep.subr.bf16.mxu0 0
    %489 = vmatpush1.bf16.msra.mxu0 0
    %490 = vmatprep.subr.bf16.mxu0 0
    %491 = vmatpush1.bf16.msra.mxu0 0
    %492 = vmatprep.subr.bf16.mxu0 0
    %493 = vmatpush1.bf16.msra.mxu0 0
    %494 = vmatprep.subr.bf16.mxu0 0
    %495 = vmatpush1.bf16.msra.mxu0 0
    %496 = vmatprep.subr.bf16.mxu0 0
    %497 = vmatpush1.bf16.msra.mxu0 0
    %498 = vmatprep.subr.bf16.mxu0 0
    %499 = vmatpush1.bf16.msra.mxu0 0
    %500 = vmatprep.subr.bf16.mxu0 0
    %501 = vmatpush1.bf16.msra.mxu0 0
    %502 = vmatprep.subr.bf16.mxu0 0
    %503 = vmatpush1.bf16.msra.mxu0 0
    %504 = vmatprep.subr.bf16.mxu0 0
    %505 = vmatpush1.bf16.msra.mxu0 0
    %506 = vmatprep.subr.bf16.mxu0 0
    %507 = vmatpush1.bf16.msra.mxu0 0
    %508 = vmatprep.subr.bf16.mxu0 0
    %509 = vmatpush1.bf16.msra.mxu0 0
    %510 = vmatprep.mubr.bf16.mxu0 0
    %511 = vmatmul.mubr.bf16.gmra.mrb[0].mxu0 %v476
    %v512 = vpop.f32.mrb[0].mxu0
    %v513 = vadd.f32 %v462, %v512
    %v514 = vpop.f32.mrb[0].mxu0
    %v515 = vpop.f32.mrb[0].mxu0
    %v516 = vpop.f32.mrb[0].mxu0
    %517 = vdwg.mxu0
    %v518 = vmax.f32 %v513, 0.0
    %s519 = scalar_lea.vmem %s6, 16
    %v520 = vld [vmem:[%s519] sm:$0xf]
    %v521 = vld [vmem:[%s519 + $0x4] sm:$0xf]
    %v522 = vld [vmem:[%s519 + $0x8] sm:$0xf]
    %v523 = vld [vmem:[%s519 + $0xc] sm:$0xf]
    %v524 = vpack.c.bf16 %v518, %v518
    %v525 = vlaneseq
    %v526 = vshrl.u32 %v525, 7
    %v527 = vsub.s32 4, %v526
    %v528 = vrot.slane %v58, %v527
    %v533 = vunpack.c.l.b16 %v520
    %v534 = vunpack.c.l.b16 %v521
    %v535 = vunpack.c.l.b16 %v522
    %v536 = vunpack.c.l.b16 %v523
    %v537 = vpack.c.b16 %v534, %v533
    %v538 = vpack.c.b16 %v536, %v535
    %v542 = vsel %vm326, %v524, 0
    %544 = vmatprep.subr.bf16.mxu0 0
    %545 = vmatpush1.bf16.msra.mxu0 %v537
    %546 = vmatprep.subr.bf16.mxu0 0
    %547 = vmatpush1.bf16.msra.mxu0 %v538
    %548 = vmatprep.subr.bf16.mxu0 0
    %549 = vmatpush1.bf16.msra.mxu0 0
    %550 = vmatprep.subr.bf16.mxu0 0
    %551 = vmatpush1.bf16.msra.mxu0 0
    %552 = vmatprep.subr.bf16.mxu0 0
    %553 = vmatpush1.bf16.msra.mxu0 0
    %554 = vmatprep.subr.bf16.mxu0 0
    %555 = vmatpush1.bf16.msra.mxu0 0
    %556 = vmatprep.subr.bf16.mxu0 0
    %557 = vmatpush1.bf16.msra.mxu0 0
    %558 = vmatprep.subr.bf16.mxu0 0
    %559 = vmatpush1.bf16.msra.mxu0 0
    %560 = vmatprep.subr.bf16.mxu0 0
    %561 = vmatpush1.bf16.msra.mxu0 0
    %562 = vmatprep.subr.bf16.mxu0 0
    %563 = vmatpush1.bf16.msra.mxu0 0
    %564 = vmatprep.subr.bf16.mxu0 0
    %565 = vmatpush1.bf16.msra.mxu0 0
    %566 = vmatprep.subr.bf16.mxu0 0
    %567 = vmatpush1.bf16.msra.mxu0 0
    %568 = vmatprep.subr.bf16.mxu0 0
    %569 = vmatpush1.bf16.msra.mxu0 0
    %570 = vmatprep.subr.bf16.mxu0 0
    %571 = vmatpush1.bf16.msra.mxu0 0
    %572 = vmatprep.subr.bf16.mxu0 0
    %573 = vmatpush1.bf16.msra.mxu0 0
    %574 = vmatprep.subr.bf16.mxu0 0
    %575 = vmatpush1.bf16.msra.mxu0 0
    %576 = vmatprep.mubr.bf16.mxu0 0
    %577 = vmatmul.mubr.bf16.gmra.mrb[0].mxu0 %v542
    %v578 = vpop.f32.mrb[0].mxu0
    %v579 = vadd.f32 %v528, %v578
    %v580 = vpop.f32.mrb[0].mxu0
    %v581 = vpop.f32.mrb[0].mxu0
    %v582 = vpop.f32.mrb[0].mxu0
    %583 = vdwg.mxu0
    %v584 = vmax.f32 %v579, 0.0
    %s585 = scalar_lea.vmem %s6, 32
    %v586 = vld [vmem:[%s585] sm:$0xf]
    %v587 = vld [vmem:[%s585 + $0x4] sm:$0xf]
    %v588 = vld [vmem:[%s585 + $0x8] sm:$0xf]
    %v589 = vld [vmem:[%s585 + $0xc] sm:$0xf]
    %v590 = vpack.c.bf16 %v584, %v584
    %v591 = vlaneseq
    %v592 = vshrl.u32 %v591, 7
    %v593 = vsub.s32 2, %v592
    %v594 = vrot.slane %v58, %v593
    %v599 = vunpack.c.l.b16 %v586
    %v600 = vunpack.c.l.b16 %v587
    %v601 = vunpack.c.l.b16 %v588
    %v602 = vunpack.c.l.b16 %v589
    %v603 = vpack.c.b16 %v600, %v599
    %v604 = vpack.c.b16 %v602, %v601
    %v608 = vsel %vm326, %v590, 0
    %610 = vmatprep.subr.bf16.mxu0 0
    %611 = vmatpush1.bf16.msra.mxu0 %v603
    %612 = vmatprep.subr.bf16.mxu0 0
    %613 = vmatpush1.bf16.msra.mxu0 %v604
    %614 = vmatprep.subr.bf16.mxu0 0
    %615 = vmatpush1.bf16.msra.mxu0 0
    %616 = vmatprep.subr.bf16.mxu0 0
    %617 = vmatpush1.bf16.msra.mxu0 0
    %618 = vmatprep.subr.bf16.mxu0 0
    %619 = vmatpush1.bf16.msra.mxu0 0
    %620 = vmatprep.subr.bf16.mxu0 0
    %621 = vmatpush1.bf16.msra.mxu0 0
    %622 = vmatprep.subr.bf16.mxu0 0
    %623 = vmatpush1.bf16.msra.mxu0 0
    %624 = vmatprep.subr.bf16.mxu0 0
    %625 = vmatpush1.bf16.msra.mxu0 0
    %626 = vmatprep.subr.bf16.mxu0 0
    %627 = vmatpush1.bf16.msra.mxu0 0
    %628 = vmatprep.subr.bf16.mxu0 0
    %629 = vmatpush1.bf16.msra.mxu0 0
    %630 = vmatprep.subr.bf16.mxu0 0
    %631 = vmatpush1.bf16.msra.mxu0 0
    %632 = vmatprep.subr.bf16.mxu0 0
    %633 = vmatpush1.bf16.msra.mxu0 0
    %634 = vmatprep.subr.bf16.mxu0 0
    %635 = vmatpush1.bf16.msra.mxu0 0
    %636 = vmatprep.subr.bf16.mxu0 0
    %637 = vmatpush1.bf16.msra.mxu0 0
    %638 = vmatprep.subr.bf16.mxu0 0
    %639 = vmatpush1.bf16.msra.mxu0 0
    %640 = vmatprep.subr.bf16.mxu0 0
    %641 = vmatpush1.bf16.msra.mxu0 0
    %642 = vmatprep.mubr.bf16.mxu0 0
    %643 = vmatmul.mubr.bf16.gmra.mrb[0].mxu0 %v608
    %v644 = vpop.f32.mrb[0].mxu0
    %v645 = vadd.f32 %v594, %v644
    %v646 = vpop.f32.mrb[0].mxu0
    %v647 = vpop.f32.mrb[0].mxu0
    %v648 = vpop.f32.mrb[0].mxu0
    %649 = vdwg.mxu0
    %v650 = vmax.f32 %v645, 0.0
    %s651 = scalar_lea.vmem %s6, 48
    %v652 = vld [vmem:[%s651] sm:$0xf]
    %v653 = vld [vmem:[%s651 + $0x4] sm:$0xf]
    %v654 = vld [vmem:[%s651 + $0x8] sm:$0xf]
    %v655 = vld [vmem:[%s651 + $0xc] sm:$0xf]
    %v656 = vpack.c.bf16 %v650, %v650
    %v657 = vlaneseq
    %v658 = vshrl.u32 %v657, 7
    %v659 = vsub.s32 5, %v658
    %v660 = vrot.slane %v58, %v659
    %v665 = vunpack.c.l.b16 %v652
    %v666 = vunpack.c.l.b16 %v653
    %v667 = vunpack.c.l.b16 %v654
    %v668 = vunpack.c.l.b16 %v655
    %v669 = vpack.c.b16 %v666, %v665
    %v670 = vpack.c.b16 %v668, %v667
    %v674 = vsel %vm326, %v656, 0
    %676 = vmatprep.subr.bf16.mxu0 0
    %677 = vmatpush1.bf16.msra.mxu0 %v669
    %678 = vmatprep.subr.bf16.mxu0 0
    %679 = vmatpush1.bf16.msra.mxu0 %v670
    %680 = vmatprep.subr.bf16.mxu0 0
    %681 = vmatpush1.bf16.msra.mxu0 0
    %682 = vmatprep.subr.bf16.mxu0 0
    %683 = vmatpush1.bf16.msra.mxu0 0
    %684 = vmatprep.subr.bf16.mxu0 0
    %685 = vmatpush1.bf16.msra.mxu0 0
    %686 = vmatprep.subr.bf16.mxu0 0
    %687 = vmatpush1.bf16.msra.mxu0 0
    %688 = vmatprep.subr.bf16.mxu0 0
    %689 = vmatpush1.bf16.msra.mxu0 0
    %690 = vmatprep.subr.bf16.mxu0 0
    %691 = vmatpush1.bf16.msra.mxu0 0
    %692 = vmatprep.subr.bf16.mxu0 0
    %693 = vmatpush1.bf16.msra.mxu0 0
    %694 = vmatprep.subr.bf16.mxu0 0
    %695 = vmatpush1.bf16.msra.mxu0 0
    %696 = vmatprep.subr.bf16.mxu0 0
    %697 = vmatpush1.bf16.msra.mxu0 0
    %698 = vmatprep.subr.bf16.mxu0 0
    %699 = vmatpush1.bf16.msra.mxu0 0
    %700 = vmatprep.subr.bf16.mxu0 0
    %701 = vmatpush1.bf16.msra.mxu0 0
    %702 = vmatprep.subr.bf16.mxu0 0
    %703 = vmatpush1.bf16.msra.mxu0 0
    %704 = vmatprep.subr.bf16.mxu0 0
    %705 = vmatpush1.bf16.msra.mxu0 0
    %706 = vmatprep.subr.bf16.mxu0 0
    %707 = vmatpush1.bf16.msra.mxu0 0
    %708 = vmatprep.mubr.bf16.mxu0 0
    %709 = vmatmul.mubr.bf16.gmra.mrb[0].mxu0 %v674
    %v710 = vpop.f32.mrb[0].mxu0
    %v711 = vadd.f32 %v660, %v710
    %v712 = vpop.f32.mrb[0].mxu0
    %v713 = vpop.f32.mrb[0].mxu0
    %v714 = vpop.f32.mrb[0].mxu0
    %715 = vdwg.mxu0
    %v716 = vmax.f32 %v711, 0.0
    %s717 = scalar_lea.vmem %s6, 64
    %v718 = vld [vmem:[%s717] sm:$0xf]
    %v719 = vld [vmem:[%s717 + $0x4] sm:$0xf]
    %v720 = vld [vmem:[%s717 + $0x8] sm:$0xf]
    %v721 = vld [vmem:[%s717 + $0xc] sm:$0xf]
    %v722 = vpack.c.bf16 %v716, %v716
    %v723 = vlaneseq
    %v724 = vshrl.u32 %v723, 7
    %v725 = vsub.s32 3, %v724
    %v726 = vrot.slane %v58, %v725
    %v731 = vunpack.c.l.b16 %v718
    %v732 = vunpack.c.l.b16 %v719
    %v733 = vunpack.c.l.b16 %v720
    %v734 = vunpack.c.l.b16 %v721
    %v735 = vpack.c.b16 %v732, %v731
    %v736 = vpack.c.b16 %v734, %v733
    %v740 = vsel %vm326, %v722, 0
    %742 = vmatprep.subr.bf16.mxu0 0
    %743 = vmatpush1.bf16.msra.mxu0 %v735
    %744 = vmatprep.subr.bf16.mxu0 0
    %745 = vmatpush1.bf16.msra.mxu0 %v736
    %746 = vmatprep.subr.bf16.mxu0 0
    %747 = vmatpush1.bf16.msra.mxu0 0
    %748 = vmatprep.subr.bf16.mxu0 0
    %749 = vmatpush1.bf16.msra.mxu0 0
    %750 = vmatprep.subr.bf16.mxu0 0
    %751 = vmatpush1.bf16.msra.mxu0 0
    %752 = vmatprep.subr.bf16.mxu0 0
    %753 = vmatpush1.bf16.msra.mxu0 0
    %754 = vmatprep.subr.bf16.mxu0 0
    %755 = vmatpush1.bf16.msra.mxu0 0
    %756 = vmatprep.subr.bf16.mxu0 0
    %757 = vmatpush1.bf16.msra.mxu0 0
    %758 = vmatprep.subr.bf16.mxu0 0
    %759 = vmatpush1.bf16.msra.mxu0 0
    %760 = vmatprep.subr.bf16.mxu0 0
    %761 = vmatpush1.bf16.msra.mxu0 0
    %762 = vmatprep.subr.bf16.mxu0 0
    %763 = vmatpush1.bf16.msra.mxu0 0
    %764 = vmatprep.subr.bf16.mxu0 0
    %765 = vmatpush1.bf16.msra.mxu0 0
    %766 = vmatprep.subr.bf16.mxu0 0
    %767 = vmatpush1.bf16.msra.mxu0 0
    %768 = vmatprep.subr.bf16.mxu0 0
    %769 = vmatpush1.bf16.msra.mxu0 0
    %770 = vmatprep.subr.bf16.mxu0 0
    %771 = vmatpush1.bf16.msra.mxu0 0
    %772 = vmatprep.subr.bf16.mxu0 0
    %773 = vmatpush1.bf16.msra.mxu0 0
    %774 = vmatprep.mubr.bf16.mxu0 0
    %775 = vmatmul.mubr.bf16.gmra.mrb[0].mxu0 %v740
    %v776 = vpop.f32.mrb[0].mxu0
    %v777 = vadd.f32 %v726, %v776
    %v778 = vpop.f32.mrb[0].mxu0
    %v779 = vpop.f32.mrb[0].mxu0
    %v780 = vpop.f32.mrb[0].mxu0
    %781 = vdwg.mxu0
    %v782 = vmax.f32 %v777, 0.0
    %s783 = scalar_lea.vmem %s6, 80
    %v784 = vld [vmem:[%s783] sm:$0xf]
    %v785 = vld [vmem:[%s783 + $0x4] sm:$0xf]
    %v786 = vld [vmem:[%s783 + $0x8] sm:$0xf]
    %v787 = vld [vmem:[%s783 + $0xc] sm:$0xf]
    %v788 = vpack.c.bf16 %v782, %v782
    %v789 = vlaneseq
    %v790 = vshrl.u32 %v789, 7
    %v791 = vsub.s32 6, %v790
    %v792 = vrot.slane %v58, %v791
    %v797 = vunpack.c.l.b16 %v784
    %v798 = vunpack.c.l.b16 %v785
    %v799 = vunpack.c.l.b16 %v786
    %v800 = vunpack.c.l.b16 %v787
    %v801 = vpack.c.b16 %v798, %v797
    %v802 = vpack.c.b16 %v800, %v799
    %v806 = vsel %vm326, %v788, 0
    %808 = vmatprep.subr.bf16.mxu0 0
    %809 = vmatpush1.bf16.msra.mxu0 %v801
    %810 = vmatprep.subr.bf16.mxu0 0
    %811 = vmatpush1.bf16.msra.mxu0 %v802
    %812 = vmatprep.subr.bf16.mxu0 0
    %813 = vmatpush1.bf16.msra.mxu0 0
    %814 = vmatprep.subr.bf16.mxu0 0
    %815 = vmatpush1.bf16.msra.mxu0 0
    %816 = vmatprep.subr.bf16.mxu0 0
    %817 = vmatpush1.bf16.msra.mxu0 0
    %818 = vmatprep.subr.bf16.mxu0 0
    %819 = vmatpush1.bf16.msra.mxu0 0
    %820 = vmatprep.subr.bf16.mxu0 0
    %821 = vmatpush1.bf16.msra.mxu0 0
    %822 = vmatprep.subr.bf16.mxu0 0
    %823 = vmatpush1.bf16.msra.mxu0 0
    %824 = vmatprep.subr.bf16.mxu0 0
    %825 = vmatpush1.bf16.msra.mxu0 0
    %826 = vmatprep.subr.bf16.mxu0 0
    %827 = vmatpush1.bf16.msra.mxu0 0
    %828 = vmatprep.subr.bf16.mxu0 0
    %829 = vmatpush1.bf16.msra.mxu0 0
    %830 = vmatprep.subr.bf16.mxu0 0
    %831 = vmatpush1.bf16.msra.mxu0 0
    %832 = vmatprep.subr.bf16.mxu0 0
    %833 = vmatpush1.bf16.msra.mxu0 0
    %834 = vmatprep.subr.bf16.mxu0 0
    %835 = vmatpush1.bf16.msra.mxu0 0
    %836 = vmatprep.subr.bf16.mxu0 0
    %837 = vmatpush1.bf16.msra.mxu0 0
    %838 = vmatprep.subr.bf16.mxu0 0
    %839 = vmatpush1.bf16.msra.mxu0 0
    %840 = vmatprep.mubr.bf16.mxu0 0
    %841 = vmatmul.mubr.bf16.gmra.mrb[0].mxu0 %v806
    %v842 = vpop.f32.mrb[0].mxu0
    %v843 = vadd.f32 %v792, %v842
    %v844 = vpop.f32.mrb[0].mxu0
    %v845 = vpop.f32.mrb[0].mxu0
    %v846 = vpop.f32.mrb[0].mxu0
    %847 = vdwg.mxu0
    %v848 = vmax.f32 %v843, 0.0
    %850 = vrot.lane.b32.xlu0 %v584, 32
    %v851 = vpop.permute.xlu0 %850
    %854 = vrot.lane.b32.xlu0 %v716, 64
    %v855 = vpop.permute.xlu0 %854
    %858 = vrot.lane.b32.xlu0 %v848, 96
    %v859 = vpop.permute.xlu0 %858
    %v861 = vsel %vm326, %v453, %v851
    %v862 = vsel %vm282, %v861, %v855
    %v863 = vsel %vm200, %v862, %v859
    %864 = vst [vmem:[%s9] sm:$0xff] %v863
    // Predicated region
    $region46: #{fingerprint_formula_encoder.1} parent=1 // pred_check
      _
    $region47: #{fingerprint_formula_encoder.1} parent=1 // pred_check_branch
      %866 = sbr.rel (0) target = $region49
    $region48: #{fingerprint_formula_encoder.1} parent=1 // pred_region
      _
    $region49: #{fingerprint_formula_encoder.1} parent=1 // pred_fallthru
      _
    // Predicated region
    $region50: #{fingerprint_formula_encoder.1} parent=1 // pred_check
      _
    $region51: #{fingerprint_formula_encoder.1} parent=1 // pred_check_branch
      %868 = sbr.rel (0) target = $region53
    $region52: #{fingerprint_formula_encoder.1} parent=1 // pred_region
      _
    $region53: #{fingerprint_formula_encoder.1} parent=1 // pred_fallthru
      _
    %869 = vsyncpa [#allocation3], 1
    %870 = vsyncpa [#allocation5], 1

</llo_original>
